<compile_context>
chip_gen: v6e
topology: v6e:2x2x1
jax: 0.10.0
libtpu: 0.0.40
codegen_flags: <defaults>
</compile_context>

<pallas_src>
import functools

import jax
import jax.numpy as jnp
from jax import lax
from jax.experimental import pallas as pl
from jax.experimental.pallas import tpu as pltpu

EPS = 1e-5


def _vmem_limit_bytes():
    """Scoped-VMEM limit derived from the chip (v7x: 64 MiB phys -> ~48 MiB;
    v5e/v6e: 128 MiB -> 96 MiB).  Falls back to a value safe on every gen."""
    try:
        cap = int(pltpu.get_tpu_info().vmem_capacity_bytes)
    except Exception:
        return 48 * 1024 * 1024
    return min((cap * 3) // 4, 96 * 1024 * 1024)


def _pick_batch_block(n, hw, csq, ce, budget_bytes=6 << 20, target_rows=512):
    """Images per pass-2 grid step: enough spatial positions per step to amortize
    the ~0.35us/step overhead, capped so the per-step VMEM footprint stays small."""
    per_img = hw * 6 * (csq + ce)          # bf16 in/out + f32 acc/padded views
    best = 1
    for bn in range(1, n + 1):
        if n % bn:
            continue
        if bn > 1 and bn * per_img > budget_bytes:
            break
        best = bn
        if bn * hw >= target_rows:
            break
    return best


# ---------------------------------------------------------------------------
# Pass 1: squeeze 1x1 conv, NCHW-native GEMM (Csq,Cin)@(Cin,HW) in bf16 with
# f32 accumulation, plus per-step partial BN statistics (no revisited blocks).
# ---------------------------------------------------------------------------
def _squeeze_kernel(x_ref, w_ref, s_ref, st_ref):
    x = x_ref[0].astype(jnp.bfloat16)                               # (Cin, HW)
    s = lax.dot_general(w_ref[...], x, (((1,), (0,)), ((), ())),
                        preferred_element_type=jnp.float32)         # (Csq, HW) f32
    s_ref[0] = s.astype(jnp.bfloat16)                               # bf16 intermediate
    ssum = jnp.sum(s, axis=1, keepdims=True)                        # stats on f32 acc
    ssq = jnp.sum(s * s, axis=1, keepdims=True)
    st_ref[0] = jnp.concatenate([ssum, ssq], axis=1)                # (Csq, 2) partial


# ---------------------------------------------------------------------------
# Pass 2: squeeze BN+ReLU, then BOTH expand convolutions (1x1 fused into the
# center tap) as 9 accumulating MXU dots over lane-shifted views of the
# zero-apron-padded, flattened activation.  Lane-dense bf16 output (already in
# NCHW channel-major order) + per-step partial expand BN statistics.
# ---------------------------------------------------------------------------
def _expand_kernel(s_ref, m_ref, sc_ref, sh_ref, w_ref, e_ref, st_ref, *,
                   width, pad):
    bn, csq, hw = s_ref.shape
    ce = e_ref.shape[1]
    zeros_apron = jnp.zeros((csq, pad), jnp.float32)
    mask_l = m_ref[0:1, :]                       # 0 where w == 0      (dx == 0 taps)
    mask_r = m_ref[1:2, :]                       # 0 where w == W - 1  (dx == 2 taps)
    ssum = jnp.zeros((ce, 1), jnp.float32)
    ssq = jnp.zeros((ce, 1), jnp.float32)
    for b in range(bn):                          # static, small (batch block)
        s = s_ref[b].astype(jnp.float32)                            # (Csq, HW)
        s = jnp.maximum(s * sc_ref[...] + sh_ref[...], 0.0)         # squeeze BN+ReLU
        # Flattened spatial axis with zero aprons: the tap (dy, dx) view is the
        # static lane window at offset pad + (dy-1)*W + (dx-1).  The aprons
        # supply the top/bottom zero padding; the two masks fix the left/right
        # columns that would otherwise wrap into the neighbouring row.
        flat = jnp.concatenate([zeros_apron, s, zeros_apron], axis=1)
        acc = jnp.zeros((ce, hw), jnp.float32)
        for dy in range(3):
            for dx in range(3):
                off = pad + (dy - 1) * width + (dx - 1)
                v = flat[:, off:off + hw]
                if dx == 0:
                    v = v * mask_l
                elif dx == 2:
                    v = v * mask_r
                acc = acc + lax.dot_general(
                    w_ref[dy * 3 + dx], v.astype(jnp.bfloat16),
                    (((1,), (0,)), ((), ())),
                    preferred_element_type=jnp.float32)             # (Ce, HW) f32
        e_ref[b] = acc.astype(jnp.bfloat16)                         # lane-dense store
        ssum = ssum + jnp.sum(acc, axis=1, keepdims=True)           # stats on f32 acc
        ssq = ssq + jnp.sum(acc * acc, axis=1, keepdims=True)
    st_ref[0] = jnp.concatenate([ssum, ssq], axis=1)                # (Ce, 2) partial


# ---------------------------------------------------------------------------
# Pass 3: expand BN (folded scale/shift) + ReLU.  Reads bf16, writes the final
# f32 NCHW tensor directly (lane axis = H*W), so no output transpose exists.
# ---------------------------------------------------------------------------
def _apply_kernel(e_ref, sc_ref, sh_ref, o_ref):
    e = e_ref[0].astype(jnp.float32)                                # (Ce, HW)
    o_ref[0] = jnp.maximum(e * sc_ref[...] + sh_ref[...], 0.0)


def _scale_shift(stats, gamma, beta, count):
    """Fold (sum, sum_sq) stats + affine params into per-channel (C, 1) scale/shift."""
    mean = stats[:, 0] / count
    var = jnp.maximum(stats[:, 1] / count - mean * mean, 0.0)       # biased var, clamped
    scale = gamma.reshape(-1) * lax.rsqrt(var + EPS)
    shift = beta.reshape(-1) - mean * scale
    return (scale.reshape(-1, 1).astype(jnp.float32),
            shift.reshape(-1, 1).astype(jnp.float32))


def fire_conv_norm(x_nchw, params):
    """x_nchw: (N, Cin, H, W) float32 (PyTorch layout). Returns (N, Ce1+Ce3, H, W)."""
    (wsq, bsq, gsq, besq,
     we1, be1, g1, bb1,
     we3, be3, g3, bb3) = params
    # Conv biases cancel exactly under the following BatchNorm mean subtraction.
    del bsq, be1, be3

    N, Cin, H, W = x_nchw.shape
    Csq = wsq.shape[1]
    Ce1 = we1.shape[1]
    Ce3 = we3.shape[3]
    Ce = Ce1 + Ce3
    HW = H * W
    M = N * HW

    vmem = _vmem_limit_bytes()

    # NCHW kept end to end: the reshapes below only merge/split adjacent dims
    # (no permutes / XLA transposes of the large tensors).
    x3 = x_nchw.reshape(N, Cin, HW).astype(jnp.float32)

    # bf16 weights for the MXU (accumulation stays f32).
    wsq_t = jnp.transpose(wsq).astype(jnp.bfloat16)                  # (Csq, Cin)

    # Per-tap fused expand weights (9, Ce, Csq): 1x1 branch = first Ce1 output
    # rows of the center tap (k=4); 3x3 branch = last Ce3 rows of every tap.
    wtap = jnp.zeros((9, Ce, Csq), jnp.float32)
    wtap = wtap.at[:, Ce1:, :].set(
        jnp.transpose(we3, (0, 1, 3, 2)).reshape(9, Ce3, Csq))
    wtap = wtap.at[4, :Ce1, :].set(jnp.transpose(we1))
    wtap = wtap.astype(jnp.bfloat16)

    # ---- pass 1: squeeze GEMM + partial squeeze BN statistics ---------------
    s_pre, st_sq = pl.pallas_call(
        _squeeze_kernel,
        grid=(N,),
        in_specs=[
            pl.BlockSpec((1, Cin, HW), lambda n: (n, 0, 0)),
            pl.BlockSpec((Csq, Cin), lambda n: (0, 0)),
        ],
        out_specs=[
            pl.BlockSpec((1, Csq, HW), lambda n: (n, 0, 0)),
            pl.BlockSpec((1, Csq, 2), lambda n: (n, 0, 0)),
        ],
        out_shape=[
            jax.ShapeDtypeStruct((N, Csq, HW), jnp.bfloat16),
            jax.ShapeDtypeStruct((N, Csq, 2), jnp.float32),
        ],
        compiler_params=pltpu.CompilerParams(
            dimension_semantics=("parallel",), vmem_limit_bytes=vmem),
    )(x3, wsq_t)

    sc_sq, sh_sq = _scale_shift(jnp.sum(st_sq, axis=0), gsq, besq, float(M))

    # Left/right column-validity masks for the 3x3 taps (tiny, precomputed once).
    col = jnp.arange(HW, dtype=jnp.int32) % W
    masks = jnp.stack([(col != 0).astype(jnp.float32),
                       (col != W - 1).astype(jnp.float32)], axis=0)  # (2, HW)

    PAD = 128 * ((W + 1 + 127) // 128)   # apron >= W+1; whole-vreg-width pieces
    bnb = _pick_batch_block(N, HW, Csq, Ce)
    nB = N // bnb

    # ---- pass 2: squeeze BN+ReLU + fused expand convs + partial statistics --
    e_pre, st_e = pl.pallas_call(
        functools.partial(_expand_kernel, width=W, pad=PAD),
        grid=(nB,),
        in_specs=[
            pl.BlockSpec((bnb, Csq, HW), lambda i: (i, 0, 0)),
            pl.BlockSpec((2, HW), lambda i: (0, 0)),
            pl.BlockSpec((Csq, 1), lambda i: (0, 0)),
            pl.BlockSpec((Csq, 1), lambda i: (0, 0)),
            pl.BlockSpec((9, Ce, Csq), lambda i: (0, 0, 0)),
        ],
        out_specs=[
            pl.BlockSpec((bnb, Ce, HW), lambda i: (i, 0, 0)),
            pl.BlockSpec((1, Ce, 2), lambda i: (i, 0, 0)),
        ],
        out_shape=[
            jax.ShapeDtypeStruct((N, Ce, HW), jnp.bfloat16),
            jax.ShapeDtypeStruct((nB, Ce, 2), jnp.float32),
        ],
        compiler_params=pltpu.CompilerParams(
            dimension_semantics=("parallel",), vmem_limit_bytes=vmem),
    )(s_pre, masks, sc_sq, sh_sq, wtap)

    g_e = jnp.concatenate([g1.reshape(-1), g3.reshape(-1)])
    b_e = jnp.concatenate([bb1.reshape(-1), bb3.reshape(-1)])
    sc_e, sh_e = _scale_shift(jnp.sum(st_e, axis=0), g_e, b_e, float(M))

    # ---- pass 3: expand BN + ReLU apply; lane-dense, already NCHW -----------
    out = pl.pallas_call(
        _apply_kernel,
        grid=(N,),
        in_specs=[
            pl.BlockSpec((1, Ce, HW), lambda n: (n, 0, 0)),
            pl.BlockSpec((Ce, 1), lambda n: (0, 0)),
            pl.BlockSpec((Ce, 1), lambda n: (0, 0)),
        ],
        out_specs=pl.BlockSpec((1, Ce, HW), lambda n: (n, 0, 0)),
        out_shape=jax.ShapeDtypeStruct((N, Ce, HW), jnp.float32),
        compiler_params=pltpu.CompilerParams(
            dimension_semantics=("parallel",), vmem_limit_bytes=vmem),
    )(e_pre, sc_e, sh_e)

    return out.reshape(N, Ce, H, W)


# ---------------------------------------------------------------------------
# Plain-JAX f32 reference (keeps the conv biases; they cancel under BN) + params.
# ---------------------------------------------------------------------------
def ref_forward(x_nchw, params):
    (wsq, bsq, gsq, besq,
     we1, be1, g1, bb1,
     we3, be3, g3, bb3) = params
    x = jnp.transpose(x_nchw, (0, 2, 3, 1))
    N, H, W, Cin = x.shape

    def bn_relu(y, g, b):
        mean = jnp.mean(y, axis=(0, 1, 2), keepdims=True)
        var = jnp.mean((y - mean) ** 2, axis=(0, 1, 2), keepdims=True)
        return jnp.maximum((y - mean) / jnp.sqrt(var + EPS)
                           * g.reshape(1, 1, 1, -1) + b.reshape(1, 1, 1, -1), 0.0)

    s = jnp.einsum("nhwc,cd->nhwd", x, wsq) + bsq.reshape(1, 1, 1, -1)
    s = bn_relu(s, gsq, besq)

    e1 = jnp.einsum("nhwc,cd->nhwd", s, we1) + be1.reshape(1, 1, 1, -1)
    e1 = bn_relu(e1, g1, bb1)

    sp = jnp.pad(s, ((0, 0), (1, 1), (1, 1), (0, 0)))
    e3 = jnp.zeros(s.shape[:3] + (we3.shape[3],)) + be3.reshape(1, 1, 1, -1)
    for dy in range(3):
        for dx in range(3):
            e3 = e3 + jnp.einsum("nhwc,cd->nhwd",
                                 sp[:, dy:dy + H, dx:dx + W, :], we3[dy, dx])
    e3 = bn_relu(e3, g3, bb3)

    out = jnp.concatenate([e1, e3], axis=-1)
    return jnp.transpose(out, (0, 3, 1, 2))


def init_params(key, cin, csq, ce1, ce3):
    ks = jax.random.split(key, 12)
    scale = 0.2
    wsq = scale * jax.random.normal(ks[0], (cin, csq), jnp.float32)
    bsq = scale * jax.random.normal(ks[1], (1, csq), jnp.float32)
    gsq = 1.0 + 0.1 * jax.random.normal(ks[2], (1, csq), jnp.float32)
    besq = 0.1 * jax.random.normal(ks[3], (1, csq), jnp.float32)
    we1 = scale * jax.random.normal(ks[4], (csq, ce1), jnp.float32)
    be1 = scale * jax.random.normal(ks[5], (1, ce1), jnp.float32)
    g1 = 1.0 + 0.1 * jax.random.normal(ks[6], (1, ce1), jnp.float32)
    bb1 = 0.1 * jax.random.normal(ks[7], (1, ce1), jnp.float32)
    # (kh, kw, in, out) — torch weight (out, in, kh, kw) transposed.
    we3 = scale * jax.random.normal(ks[8], (3, 3, csq, ce3), jnp.float32)
    be3 = scale * jax.random.normal(ks[9], (1, ce3), jnp.float32)
    g3 = 1.0 + 0.1 * jax.random.normal(ks[10], (1, ce3), jnp.float32)
    bb3 = 0.1 * jax.random.normal(ks[11], (1, ce3), jnp.float32)
    return (wsq, bsq, gsq, besq, we1, be1, g1, bb1, we3, be3, g3, bb3)


if __name__ == "__main__":
    # Small shapes consistent with the module: N=2, Cin=32, H=W=16,
    # squeeze=8, expand1x1=8, expand3x3=8 -> 16 output channels.
    N, Cin, H, W = 2, 32, 16, 16
    Csq, Ce1, Ce3 = 8, 8, 8

    key = jax.random.PRNGKey(0)
    kx, kp = jax.random.split(key)
    x = jax.random.normal(kx, (N, Cin, H, W), jnp.float32)
    params = init_params(kp, Cin, Csq, Ce1, Ce3)

    y = fire_conv_norm(x, params)
    y = jax.block_until_ready(y)

    y_ref = ref_forward(x, params)
    assert y.shape == (N, Ce1 + Ce3, H, W), y.shape
    assert bool(jnp.all(jnp.isfinite(y)))
    # Tolerance widened vs. the all-f32 reference because (per the perf review)
    # MXU operands and the inter-pass intermediates are bf16; outputs are O(1).
    max_err = float(jnp.max(jnp.abs(y - y_ref)))
    mean_err = float(jnp.mean(jnp.abs(y - y_ref)))
    assert max_err < 4e-2, max_err
    assert mean_err < 1e-2, mean_err

    print("KERNEL_OK")
</pallas_src>

<mosaic_0001>
module attributes {stable_mosaic.version = 11 : i64} {
  func.func @_squeeze_kernel(%arg0: i32, %arg1: memref<1x32x256xf32, #tpu.memory_space<vmem>>, %arg2: memref<8x32xbf16, #tpu.memory_space<vmem>>, %arg3: memref<1x8x256xbf16, #tpu.memory_space<vmem>>, %arg4: memref<1x8x2xf32, #tpu.memory_space<vmem>>) attributes {dimension_semantics = [#tpu.dimension_semantics<parallel>], iteration_bounds = array<i64: 2>, scalar_prefetch = 0 : i64, scratch_operands = 0 : i64, tpu.core_type = #tpu.core_type<tc>, window_params = [{transform_indices = @transform_0, window_bounds = array<i64: 1, 32, 256>}, {pipeline_mode = #tpu.pipeline_mode<synchronous>, transform_indices = @transform_1, window_bounds = array<i64: 8, 32>}, {transform_indices = @transform_2, window_bounds = array<i64: 1, 8, 256>}, {transform_indices = @transform_3, window_bounds = array<i64: 1, 8, 2>}]} {
    %c0 = arith.constant 0 : index
    %c0_0 = arith.constant 0 : index
    %c0_1 = arith.constant 0 : index
    %0 = vector.load %arg1[%c0, %c0_0, %c0_1] : memref<1x32x256xf32, #tpu.memory_space<vmem>>, vector<1x32x256xf32>
    %1 = vector.shape_cast %0 : vector<1x32x256xf32> to vector<32x256xf32>
    %2 = arith.truncf %1 : vector<32x256xf32> to vector<32x256xbf16>
    %c0_2 = arith.constant 0 : index
    %c0_3 = arith.constant 0 : index
    %3 = vector.load %arg2[%c0_2, %c0_3] : memref<8x32xbf16, #tpu.memory_space<vmem>>, vector<8x32xbf16>
    %cst = arith.constant dense<0.000000e+00> : vector<8x256xf32>
    %4 = tpu.matmul %3, %2, %cst {dimension_numbers = #tpu.dot_dimension_numbers<[1], [0], [0], [1], [0, 0, 1, 1], [], []>} : vector<8x32xbf16>, vector<32x256xbf16>, vector<8x256xf32> -> vector<8x256xf32>
    %5 = arith.truncf %4 : vector<8x256xf32> to vector<8x256xbf16>
    %c0_4 = arith.constant 0 : index
    %c0_5 = arith.constant 0 : index
    %c0_6 = arith.constant 0 : index
    %6 = vector.load %arg3[%c0_4, %c0_5, %c0_6] : memref<1x8x256xbf16, #tpu.memory_space<vmem>>, vector<1x8x256xbf16>
    %7 = vector.shape_cast %6 : vector<1x8x256xbf16> to vector<8x256xbf16>
    %8 = vector.shape_cast %5 : vector<8x256xbf16> to vector<1x8x256xbf16>
    tpu.vector_store %arg3[%c0_4, %c0_5, %c0_6], %8 {strides = array<i32>} : memref<1x8x256xbf16, #tpu.memory_space<vmem>>, vector<1x8x256xbf16>,
    %cst_7 = arith.constant dense<0.000000e+00> : vector<8xf32>
    %9 = vector.multi_reduction <add>, %4, %cst_7 [1] : vector<8x256xf32> to vector<8xf32>
    %10 = vector.shape_cast %9 : vector<8xf32> to vector<8x1xf32>
    %11 = arith.mulf %4, %4 : vector<8x256xf32>
    %cst_8 = arith.constant dense<0.000000e+00> : vector<8xf32>
    %12 = vector.multi_reduction <add>, %11, %cst_8 [1] : vector<8x256xf32> to vector<8xf32>
    %13 = vector.shape_cast %12 : vector<8xf32> to vector<8x1xf32>
    %14 = tpu.concatenate %10, %13 in 1 : vector<8x1xf32>, vector<8x1xf32> -> vector<8x2xf32>
    %c0_9 = arith.constant 0 : index
    %c0_10 = arith.constant 0 : index
    %c0_11 = arith.constant 0 : index
    %15 = vector.load %arg4[%c0_9, %c0_10, %c0_11] : memref<1x8x2xf32, #tpu.memory_space<vmem>>, vector<1x8x2xf32>
    %16 = vector.shape_cast %15 : vector<1x8x2xf32> to vector<8x2xf32>
    %17 = vector.shape_cast %14 : vector<8x2xf32> to vector<1x8x2xf32>
    tpu.vector_store %arg4[%c0_9, %c0_10, %c0_11], %17 {strides = array<i32>} : memref<1x8x2xf32, #tpu.memory_space<vmem>>, vector<1x8x2xf32>,
    return
  }
  func.func @transform_0(%arg0: i32) -> (i32, i32, i32) {
    %c0_i32 = arith.constant 0 : i32
    %c0_i32_0 = arith.constant 0 : i32
    %c0_i32_1 = arith.constant 0 : i32
    return %arg0, %c0_i32, %c0_i32_0 : i32, i32, i32
  }
  func.func @transform_1(%arg0: i32) -> (i32, i32) {
    %c0_i32 = arith.constant 0 : i32
    %c0_i32_0 = arith.constant 0 : i32
    %c0_i32_1 = arith.constant 0 : i32
    return %c0_i32, %c0_i32_0 : i32, i32
  }
  func.func @transform_2(%arg0: i32) -> (i32, i32, i32) {
    %c0_i32 = arith.constant 0 : i32
    %c0_i32_0 = arith.constant 0 : i32
    %c0_i32_1 = arith.constant 0 : i32
    return %arg0, %c0_i32, %c0_i32_0 : i32, i32, i32
  }
  func.func @transform_3(%arg0: i32) -> (i32, i32, i32) {
    %c0_i32 = arith.constant 0 : i32
    %c0_i32_0 = arith.constant 0 : i32
    %c0_i32_1 = arith.constant 0 : i32
    return %arg0, %c0_i32, %c0_i32_0 : i32, i32, i32
  }
}

</mosaic_0001>

<llo_original>
// kernel: tpu_custom_call.1
$region0: #{tpu_custom_call.1}
  #allocation0 [shape = 'u32[]', space=smem, size = 0x4, offset = 0x4, fixed_abs, tag = 'smem constant byte address 0x4 - core index']
  #allocation1 [shape = 'u32[144,128]{1,0:T(1,128)}', space=vmem, size = 0x12000, scoped, tag = 'internal scratch']
  %s0 = inlined_call_operand.hbm [shape: f32[2,32,256], index: 0, kind: input, shape index: {}]
  %s1 = inlined_call_operand.hbm [shape: bf16[8,32], index: 1, kind: input, shape index: {}]
  %s2 = inlined_call_operand.hbm [shape: bf16[2,8,256], index: 2, kind: output, shape index: {0}]
  %s3 = inlined_call_operand.vmem [shape: f32[2,8,2], index: 3, kind: output, shape index: {1}]
  %4 = xla_tuple %s2, %s3
  %s5 = sld [smem:[#allocation0]]
  $region57: #{tpu_custom_call.1} parent=0
    _
  %s7 = ssub.s32 1, %s5
  %s8 = scalar_select 0, %s7, %s5
  $region1: #{tpu_custom_call.1} parent=0
    #allocation2 [shape = 'u8[65536]{0}', space=vmem, size = 0x10000, scoped, tag = 'input window, operand 0']
    #allocation3 [shape = 's32[2]{0}', space=sflag, size = 0x8, scoped, tag = 'scoped memory for tpu_custom_call.1']
    #allocation4 [shape = 's32[2]{0}', space=sflag, size = 0x8, scoped, tag = 'scoped memory for tpu_custom_call.1']
    #allocation5 [shape = 'u8[2048]{0}', space=vmem, size = 0x800, scoped, tag = 'input window, operand 1, single buffered']
    #allocation6 [shape = 's32[1]{0}', space=sflag, size = 0x4, scoped, tag = 'scoped memory for tpu_custom_call.1']
    #allocation7 [shape = 'u8[8192]{0}', space=vmem, size = 0x2000, scoped, tag = 'output window, operand 0']
    %9 = vsyncpa [#allocation3], 0
    %s10 = scalar_lea.sflag [#allocation3], 1
    %11 = vsyncpa %s10, 0
    %12 = vsyncpa [#allocation6], 0
    %13 = vsyncpa [#allocation4], 0
    %s14 = scalar_lea.sflag [#allocation4], 1
    %15 = vsyncpa %s14, 0
    loop: start=0, step=1, limit=4
    $region2: #{tpu_custom_call.1} parent=1 // loop_pre_header
      _
    $region3: #{tpu_custom_call.1} parent=1 // loop_header
      %s17 = sphi 0, %s21
      %p18 = scmp.ge.s32.totalorder %s17, 4
      %s27 = sphi 0, %s29
      %s30 = sphi 0, %s27
      %s31 = sphi 0, %s30
      %s47 = sphi 0, %s31
      %s51 = sphi 0, %s51
      %s53 = sphi 0, %s51
      %s54 = sphi 0, %s53
      %s68 = sphi 0, %s54
      %s74 = sphi 0, %s76
      %s77 = sphi 0, %s74
      %s78 = sphi 0, %s77
      %s94 = sphi 0, %s78
      %s100 = sphi 0, %s102
      %s103 = sphi 0, %s100
      %s104 = sphi 0, %s103
      %s120 = sphi 0, %s104
    $region4: #{tpu_custom_call.1} parent=1 // loop_header_branch
      %20 = sbr.rel (%p18) target = $region8
    $region5: #{tpu_custom_call.1} parent=1 // loop_body
      %s22 = ssub.s32 %s17, 1
      %s23 = ssub.s32 %s17, 2
      %s24 = sadd.s32 %s17, 1
      %s25 = ssub.s32 %s17, %s24
      %p26 = scmp.eq.s32.totalorder %s25, 0
      %s28 = sadd.s32 %s27, 1
      %s29 = scalar_select %p26, %s27, %s28
      %p32 = pneg %p26
      %p33 = scmp.eq.s32.totalorder %s17, 1
      %p34 = por %p32, %p33
      %p35 = scmp.ne.s32.totalorder %s27, %s30
      %p36 = scmp.eq.s32.totalorder %s17, 0
      %p37 = por %p35, %p36
      %p38 = scmp.ne.s32.totalorder %s27, %s30
      %p39 = scmp.eq.s32.totalorder %s22, 1
      %p40 = por %p38, %p39
      %p41 = scmp.ne.s32.totalorder %s30, %s31
      %p42 = scmp.eq.s32.totalorder %s22, 0
      %p43 = por %p41, %p42
      %p44 = scmp.ne.s32.totalorder %s30, %s31
      %p45 = scmp.eq.s32.totalorder %s23, 1
      %p46 = por %p44, %p45
      %p48 = scmp.ne.s32.totalorder %s31, %s47
      %p49 = scmp.eq.s32.totalorder %s23, 0
      %p50 = por %p48, %p49
      %s52 = sadd.s32 %s51, 1
      %p55 = scmp.eq.s32.totalorder %s17, 1
      %p56 = scmp.ne.s32.totalorder %s51, %s53
      %p57 = scmp.eq.s32.totalorder %s17, 0
      %p58 = por %p56, %p57
      %p59 = scmp.ne.s32.totalorder %s51, %s53
      %p60 = scmp.eq.s32.totalorder %s22, 1
      %p61 = por %p59, %p60
      %p62 = scmp.ne.s32.totalorder %s53, %s54
      %p63 = scmp.eq.s32.totalorder %s22, 0
      %p64 = por %p62, %p63
      %p65 = scmp.ne.s32.totalorder %s53, %s54
      %p66 = scmp.eq.s32.totalorder %s23, 1
      %p67 = por %p65, %p66
      %p69 = scmp.ne.s32.totalorder %s54, %s68
      %p70 = scmp.eq.s32.totalorder %s23, 0
      %p71 = por %p69, %p70
      %s72 = ssub.s32 %s17, %s24
      %p73 = scmp.eq.s32.totalorder %s72, 0
      %s75 = sadd.s32 %s74, 1
      %s76 = scalar_select %p73, %s74, %s75
      %p79 = pneg %p73
      %p80 = scmp.eq.s32.totalorder %s17, 1
      %p81 = por %p79, %p80
      %p82 = scmp.ne.s32.totalorder %s74, %s77
      %p83 = scmp.eq.s32.totalorder %s17, 0
      %p84 = por %p82, %p83
      %p85 = scmp.ne.s32.totalorder %s74, %s77
      %p86 = scmp.eq.s32.totalorder %s22, 1
      %p87 = por %p85, %p86
      %p88 = scmp.ne.s32.totalorder %s77, %s78
      %p89 = scmp.eq.s32.totalorder %s22, 0
      %p90 = por %p88, %p89
      %p91 = scmp.ne.s32.totalorder %s77, %s78
      %p92 = scmp.eq.s32.totalorder %s23, 1
      %p93 = por %p91, %p92
      %p95 = scmp.ne.s32.totalorder %s78, %s94
      %p96 = scmp.eq.s32.totalorder %s23, 0
      %p97 = por %p95, %p96
      %s98 = ssub.s32 %s17, %s24
      %p99 = scmp.eq.s32.totalorder %s98, 0
      %s101 = sadd.s32 %s100, 1
      %s102 = scalar_select %p99, %s100, %s101
      %p105 = pneg %p99
      %p106 = scmp.eq.s32.totalorder %s17, 1
      %p107 = por %p105, %p106
      %p108 = scmp.ne.s32.totalorder %s100, %s103
      %p109 = scmp.eq.s32.totalorder %s17, 0
      %p110 = por %p108, %p109
      %p111 = scmp.ne.s32.totalorder %s100, %s103
      %p112 = scmp.eq.s32.totalorder %s22, 1
      %p113 = por %p111, %p112
      %p114 = scmp.ne.s32.totalorder %s103, %s104
      %p115 = scmp.eq.s32.totalorder %s22, 0
      %p116 = por %p114, %p115
      %p117 = scmp.ne.s32.totalorder %s103, %s104
      %p118 = scmp.eq.s32.totalorder %s23, 1
      %p119 = por %p117, %p118
      %p121 = scmp.ne.s32.totalorder %s104, %s120
      %p122 = scmp.eq.s32.totalorder %s23, 0
      %p123 = por %p121, %p122
      %p124 = scmp.le.s32.totalorder 1, %s17
      %p125 = scmp.lt.s32.totalorder %s17, 3
      %p126 = pnand %p124, %p125
      %p127 = pneg %p126
      // Predicated region
      $region9: #{tpu_custom_call.1} parent=5 // pred_check
        _
      $region10: #{tpu_custom_call.1} parent=5 // pred_check_branch
        %129 = sbr.rel (%p126) target = $region12
      $region11: #{tpu_custom_call.1} parent=5 // pred_region
        %s130 = ssub.s32 %s17, 1
        // Predicated region
        $region13: #{tpu_custom_call.1} parent=11 // pred_check
          %p131 = pneg %p64
        $region14: #{tpu_custom_call.1} parent=11 // pred_check_branch
          %133 = sbr.rel (%p131) target = $region16
        $region15: #{tpu_custom_call.1} parent=11 // pred_region
          %s135 = ssub.s32 64, 64
          %136 = vsyncadd [#allocation6], %s135
          %s138 = sshll.u32 [#allocation5], 4
          %s139 = int_to_ptr.vmem [resolvable:$true] %s138
          %141 = dma.hbm_to_vmem [thread:$0]  %s1, 64, %s139, [#allocation6]
        $region16: #{tpu_custom_call.1} parent=11 // pred_fallthru
          _
      $region12: #{tpu_custom_call.1} parent=5 // pred_fallthru
        _
      %p142 = scmp.lt.s32.totalorder %s17, 2
      // Predicated region
      $region17: #{tpu_custom_call.1} parent=5 // pred_check
        %p143 = pneg %p142
      $region18: #{tpu_custom_call.1} parent=5 // pred_check_branch
        %145 = sbr.rel (%p143) target = $region20
      $region19: #{tpu_custom_call.1} parent=5 // pred_region
        // Predicated region
        $region21: #{tpu_custom_call.1} parent=19 // pred_check
          %p146 = pneg %p37
        $region22: #{tpu_custom_call.1} parent=19 // pred_check_branch
          %148 = sbr.rel (%p146) target = $region24
        $region23: #{tpu_custom_call.1} parent=19 // pred_region
          %s149 = sand.u32 %s27, 1
          %s150 = scalar_lea.sflag [#allocation3], %s149
          %s151 = sand.u32 %s27, 1
          %s152 = smul.addr %s151, 64
          %s153 = scalar_lea.vmem [#allocation2], %s152
          %s155 = ssub.s32 1024, 1024
          %156 = vsyncadd %s150, %s155
          %s157 = smul.addr %s17, 8
          %s158 = smul.addr %s157, 128
          %s159 = scalar_lea.hbm %s0, %s158
          %s160 = sshll.u32 %s153, 4
          %s161 = int_to_ptr.vmem [resolvable:$true] %s160
          %166 = dma.hbm_to_vmem [thread:$0]  %s159, 1024, %s161, %s150, 256, 256, 16
        $region24: #{tpu_custom_call.1} parent=19 // pred_fallthru
          _
      $region20: #{tpu_custom_call.1} parent=5 // pred_fallthru
        _
      %p167 = scmp.le.s32.totalorder 1, %s17
      %p168 = scmp.lt.s32.totalorder %s17, 3
      %p169 = pnand %p167, %p168
      %p170 = pneg %p169
      // Predicated region
      $region25: #{tpu_custom_call.1} parent=5 // pred_check
        _
      $region26: #{tpu_custom_call.1} parent=5 // pred_check_branch
        %172 = sbr.rel (%p169) target = $region28
      $region27: #{tpu_custom_call.1} parent=5 // pred_region
        %s173 = ssub.s32 %s17, 1
        %s174 = sand.u32 %s30, 1
        %s175 = scalar_lea.sflag [#allocation3], %s174
        %s176 = sand.u32 %s30, 1
        %s177 = smul.addr %s176, 64
        %s178 = scalar_lea.vmem [#allocation2], %s177
        // Predicated region
        $region29: #{tpu_custom_call.1} parent=27 // pred_check
          %p179 = pneg %p43
        $region30: #{tpu_custom_call.1} parent=27 // pred_check_branch
          %181 = sbr.rel (%p179) target = $region32
        $region31: #{tpu_custom_call.1} parent=27 // pred_region
          %182 = dma.done %s175, 1024
        $region32: #{tpu_custom_call.1} parent=27 // pred_fallthru
          _
        // Predicated region
        $region33: #{tpu_custom_call.1} parent=27 // pred_check
          %p183 = pneg %p64
        $region34: #{tpu_custom_call.1} parent=27 // pred_check_branch
          %185 = sbr.rel (%p183) target = $region36
        $region35: #{tpu_custom_call.1} parent=27 // pred_region
          %186 = dma.done [#allocation6], 64
        $region36: #{tpu_custom_call.1} parent=27 // pred_fallthru
          _
        %s187 = sand.u32 %s30, 1
        %s188 = scalar_lea.sflag [#allocation3], %s187
        %s189 = sand.u32 %s30, 1
        %s190 = smul.addr %s189, 64
        %s191 = scalar_lea.vmem [#allocation2], %s190
        %p192 = pneg %p43
        %p193 = pneg %p40
        %p194 = pneg %p64
        %p195 = pneg %p61
        %p196 = pneg %p90
        %p197 = pneg %p87
        %s198 = sand.u32 %s77, 1
        %s199 = scalar_lea.sflag [#allocation4], %s198
        %s200 = sand.u32 %s77, 1
        %s201 = smul.addr %s200, 8
        %s202 = scalar_lea.vmem [#allocation7], %s201
        %p203 = pneg %p116
        %p204 = pneg %p113
        %p205 = scmp.lt.s32.totalorder %s22, 1
        %s206 = scalar_select %p205, %s22, 1
        %s207 = smul.addr %s206, 8
        %s208 = scalar_lea.vmem %s3, %s207
        %p209 = scmp.lt.s32.totalorder %s22, 1
        %s210 = scalar_select %p209, %s22, 1
        %s211 = smul.addr %s210, 8
        %s212 = scalar_lea.vmem %s3, %s211
        %v214 = vld [vmem:[%s178] sm:$0xff]
        %v215 = vld [vmem:[%s178 + $0x8] sm:$0xff]
        %v216 = vld [vmem:[%s178 + $0x10] sm:$0xff]
        %v217 = vld [vmem:[%s178 + $0x18] sm:$0xff]
        %v218 = vld [vmem:[%s178 + $0x20] sm:$0xff]
        %v219 = vld [vmem:[%s178 + $0x28] sm:$0xff]
        %v220 = vld [vmem:[%s178 + $0x30] sm:$0xff]
        %v221 = vld [vmem:[%s178 + $0x38] sm:$0xff]
        %v222 = vpack.c.bf16 %v216, %v214
        %v223 = vpack.c.bf16 %v217, %v215
        %v224 = vpack.c.bf16 %v220, %v218
        %v225 = vpack.c.bf16 %v221, %v219
        %v226 = vld [vmem:[#allocation5] sm:$0xf]
        %vm227 = vcmask 261120
        %v229 = vsel %vm227, %v226, 0
        %231 = vmatprep.subr.bf16.mxu0 0
        %232 = vmatpush1.bf16.msra.mxu0 0
        %233 = vmatprep.subr.bf16.mxu0 0
        %234 = vmatpush1.bf16.msra.mxu0 0
        %235 = vmatprep.subr.bf16.mxu0 0
        %236 = vmatpush1.bf16.msra.mxu0 0
        %237 = vmatprep.subr.bf16.mxu0 0
        %238 = vmatpush1.bf16.msra.mxu0 0
        %239 = vmatprep.subr.bf16.mxu0 0
        %240 = vmatpush1.bf16.msra.mxu0 0
        %241 = vmatprep.subr.bf16.mxu0 0
        %242 = vmatpush1.bf16.msra.mxu0 0
        %243 = vmatprep.subr.bf16.mxu0 %v225
        %244 = vmatpush1.bf16.msra.mxu0 %v224
        %245 = vmatprep.subr.bf16.mxu0 %v223
        %246 = vmatpush1.bf16.msra.mxu0 %v222
        %247 = vmatprep.subr.bf16.mxu0 0
        %248 = vmatpush2.bf16.msra.mxu0 0
        %249 = vmatprep.subr.bf16.mxu0 0
        %250 = vmatpush2.bf16.msra.mxu0 0
        %251 = vmatprep.subr.bf16.mxu0 0
        %252 = vmatpush2.bf16.msra.mxu0 0
        %253 = vmatprep.subr.bf16.mxu0 0
        %254 = vmatpush2.bf16.msra.mxu0 0
        %255 = vmatprep.subr.bf16.mxu0 0
        %256 = vmatpush2.bf16.msra.mxu0 0
        %257 = vmatprep.subr.bf16.mxu0 0
        %258 = vmatpush2.bf16.msra.mxu0 0
        %259 = vmatprep.subr.bf16.mxu0 0
        %260 = vmatpush2.bf16.msra.mxu0 0
        %261 = vmatprep.subr.bf16.mxu0 0
        %262 = vmatpush2.bf16.msra.mxu0 0
        %263 = vmatprep.mubr.bf16.mxu0 0
        %264 = vmatmul.mubr.bf16.gmra.mxu0 %v229
        %v265 = vpop.f32.mrf.mxu0
        %v266 = vadd.f32 0.0, %v265
        %v267 = vpop.f32.mrf.mxu0
        %v268 = vadd.f32 0.0, %v267
        %v269 = vpop.f32.mrf.mxu0
        %v270 = vpop.f32.mrf.mxu0
        %271 = vdwg.mxu0
        %v272 = vpack.c.bf16 %v266, %v266
        %v273 = vpack.c.bf16 %v268, %v268
        %v276 = vunpack.c.l.b16 %v272
        %v277 = vunpack.c.l.b16 %v273
        %v278 = vpack.c.b16 %v277, %v276
        %280 = vst [vmem:[%s202] sm:$0xff] %v278
        %v281 = vadd.f32 %v266, %v268
        %282 = vadd.xlane.f32.xlu0 %v281
        %v283 = vpop.xlane.xlu0 %282
        %v284 = vmul.f32 %v266, %v266
        %v285 = vmul.f32 %v268, %v268
        %v286 = vadd.f32 %v284, %v285
        %287 = vadd.xlane.f32.xlu0 %v286
        %v288 = vpop.xlane.xlu0 %287
        %vm289 = vcmask 7168
        %v290 = vsel %vm289, %v283, %v288
        %vm291 = vcmask 15360
        %292 = vst.msk [vmem:[%s212] sm:$0xff] %vm291, %v290
        %s293 = sand.u32 %s77, 1
        %s294 = scalar_lea.sflag [#allocation4], %s293
        %s295 = sand.u32 %s77, 1
        %s296 = smul.addr %s295, 8
        %s297 = scalar_lea.vmem [#allocation7], %s296
        %p298 = scmp.lt.s32.totalorder %s22, 1
        %s299 = scalar_select %p298, %s22, 1
        %s300 = smul.addr %s299, 8
        %s301 = scalar_lea.vmem %s3, %s300
        // Predicated region
        $region37: #{tpu_custom_call.1} parent=27 // pred_check
          %p302 = pneg %p87
        $region38: #{tpu_custom_call.1} parent=27 // pred_check_branch
          %304 = sbr.rel (%p302) target = $region40
        $region39: #{tpu_custom_call.1} parent=27 // pred_region
          %s306 = ssub.s32 128, 128
          %307 = vsyncadd %s294, %s306
          %s308 = smul.addr %s22, 2
          %s309 = smul.addr %s308, 64
          %s310 = scalar_lea.hbm %s2, %s309
          %s312 = sshll.u32 %s297, 4
          %s313 = int_to_ptr.vmem [resolvable:$true] %s312
          %315 = dma.vmem_to_hbm [thread:$0]  %s313, 128, %s310, %s294
        $region40: #{tpu_custom_call.1} parent=27 // pred_fallthru
          _
        // Predicated region
        $region41: #{tpu_custom_call.1} parent=27 // pred_check
          %p316 = pneg %p113
        $region42: #{tpu_custom_call.1} parent=27 // pred_check_branch
          %318 = sbr.rel (%p316) target = $region44
        $region43: #{tpu_custom_call.1} parent=27 // pred_region
          _
        $region44: #{tpu_custom_call.1} parent=27 // pred_fallthru
          _
      $region28: #{tpu_custom_call.1} parent=5 // pred_fallthru
        _
      %p319 = scmp.le.s32.totalorder 2, %s17
      // Predicated region
      $region45: #{tpu_custom_call.1} parent=5 // pred_check
        %p320 = pneg %p319
      $region46: #{tpu_custom_call.1} parent=5 // pred_check_branch
        %322 = sbr.rel (%p320) target = $region48
      $region47: #{tpu_custom_call.1} parent=5 // pred_region
        %s323 = ssub.s32 %s17, 2
        // Predicated region
        $region49: #{tpu_custom_call.1} parent=47 // pred_check
          %p324 = pneg %p93
        $region50: #{tpu_custom_call.1} parent=47 // pred_check_branch
          %326 = sbr.rel (%p324) target = $region52
        $region51: #{tpu_custom_call.1} parent=47 // pred_region
          %s327 = sand.u32 %s78, 1
          %s328 = scalar_lea.sflag [#allocation4], %s327
          %s329 = sand.u32 %s78, 1
          %s330 = smul.addr %s329, 8
          %s331 = scalar_lea.vmem [#allocation7], %s330
          %332 = dma.done %s328, 128
        $region52: #{tpu_custom_call.1} parent=47 // pred_fallthru
          _
        // Predicated region
        $region53: #{tpu_custom_call.1} parent=47 // pred_check
          %p333 = pneg %p119
        $region54: #{tpu_custom_call.1} parent=47 // pred_check_branch
          %335 = sbr.rel (%p333) target = $region56
        $region55: #{tpu_custom_call.1} parent=47 // pred_region
          %p336 = scmp.lt.s32.totalorder %s23, 1
          %s337 = scalar_select %p336, %s23, 1
          %s338 = smul.addr %s337, 8
          %s339 = scalar_lea.vmem %s3, %s338
        $region56: #{tpu_custom_call.1} parent=47 // pred_fallthru
          _
      $region48: #{tpu_custom_call.1} parent=5 // pred_fallthru
        _
    $region6: #{tpu_custom_call.1} parent=1 // loop_footer
      %s21 = sadd.s32 1, %s17
    $region7: #{tpu_custom_call.1} parent=1 // loop_footer_branch
      %16 = sbr.rel target = $region3
    $region8: #{tpu_custom_call.1} parent=1 // loop_exit
      _
    %340 = vsyncpa [#allocation3], 1
    %s341 = scalar_lea.sflag [#allocation3], 1
    %342 = vsyncpa %s341, 1
    %343 = vsyncpa [#allocation6], 1
    %344 = vsyncpa [#allocation4], 1
    %s345 = scalar_lea.sflag [#allocation4], 1
    %346 = vsyncpa %s345, 1

</llo_original>
